<compile_context>
chip_gen: v6e
topology: v6e:2x2x1
jax: 0.10.0
libtpu: 0.0.40
codegen_flags: <defaults>
</compile_context>

<pallas_src>
import jax
import jax.numpy as jnp
import numpy as np
from jax.experimental import pallas as pl
from jax.experimental.pallas import tpu as pltpu


def decoder_kernel(b_e_ref,                                    # SMEM scalar
                   enc_ref, h0_ref, vec_ref, gi_emb_ref,       # VMEM activations / packed vecs
                   w_ih_ctx_T_ref, w_hh_T_ref, w_fc1_T_ref, w_emb_T_ref,   # VMEM bf16 weights
                   logits_ref, h_new_ref):
    Bp, S, H = enc_ref.shape
    E = w_fc1_T_ref.shape[1]

    enc = enc_ref[...]                                         # (Bp, S, H) f32
    h0 = h0_ref[...]                                           # (Bp, H)   f32

    # packed small vectors: row 0 = w_e_h, row 1 = w_e_enc, row 2 = b_hh, row 3 = b_fc1
    w_e_h = vec_ref[0:1, :H]                                   # (1, H)
    w_e_enc = vec_ref[1:2, :H]                                 # (1, H)
    b_hh = vec_ref[2:3, :3 * H]                                # (1, 3H)
    b_fc1 = vec_ref[3:4, :E]                                   # (1, E)
    b_e = b_e_ref[0]                                           # scalar (SMEM)

    # --- additive attention: e = relu(Linear_{2H->1}([h ; enc])); softmax over S ---
    # scores laid out (B, S): S on the lane axis -> lane-dense softmax reductions.
    # Reductions stay on VPU/XLU (an MXU matvec would waste 127/128 result lanes).
    score_h = jnp.sum(h0 * w_e_h, axis=-1, keepdims=True)      # (Bp, 1)
    score_enc = jnp.sum(enc * w_e_enc[None, :, :], axis=-1)    # (Bp, S)
    scores = jnp.maximum(score_enc + score_h + b_e, 0.0)       # (Bp, S)
    m = jnp.max(scores, axis=-1, keepdims=True)
    p = jnp.exp(scores - m)
    denom = jnp.sum(p, axis=-1, keepdims=True)                 # (Bp, 1)
    attn = p / denom                                           # exact divide (accuracy)
    context = jnp.sum(attn[:, :, None] * enc, axis=1)          # (Bp, H)

    # --- single-step GRU cell, PyTorch gate order (r, z, n); weights (in, out) bf16 ---
    # gi_emb already contains  w_emb[token] @ w_ih_emb.T + b_ih  (host prefused gather).
    gi = (jnp.dot(context.astype(jnp.bfloat16), w_ih_ctx_T_ref[...],
                  preferred_element_type=jnp.float32) + gi_emb_ref[...])       # (Bp, 3H)
    gh = (jnp.dot(h0.astype(jnp.bfloat16), w_hh_T_ref[...],
                  preferred_element_type=jnp.float32) + b_hh)                  # (Bp, 3H)
    r = jax.nn.sigmoid(gi[:, :H] + gh[:, :H])
    z = jax.nn.sigmoid(gi[:, H:2 * H] + gh[:, H:2 * H])
    n = jnp.tanh(gi[:, 2 * H:] + r * gh[:, 2 * H:])
    h_new = (1.0 - z) * n + z * h0                             # (Bp, H) f32

    # --- fc1 then tied output projection (lane-dense padded vocab; pad cols are 0,
    #     the wrapper slices them off before the logits ever escape) ---
    y1 = (jnp.dot(h_new.astype(jnp.bfloat16), w_fc1_T_ref[...],
                  preferred_element_type=jnp.float32) + b_fc1)                 # (Bp, E)
    logits_ref[...] = jnp.dot(y1.astype(jnp.bfloat16), w_emb_T_ref[...],
                              preferred_element_type=jnp.float32)              # (Bp, Vpad)
    h_new_ref[...] = h_new


def prepare_params(params):
    """One-time host-side weight prep: transposes, bias prefusion, packing, bf16 cast."""
    V, E = params["w_emb"].shape
    three_h = params["w_ih"].shape[0]
    H = three_h // 3
    Vpad = ((V + 127) // 128) * 128
    W = max(3 * H, E, H)

    w_ih_ctx = params["w_ih"][:, :H]                           # (3H, H) acts on context
    w_ih_emb = params["w_ih"][:, H:]                           # (3H, E) acts on embedding
    # Prefuse embedding lookup with the GRU input projection and b_ih (HIGHEST precision
    # so prefusion error does not compound with in-kernel bf16 error).
    emb_gates = (jnp.dot(params["w_emb"], w_ih_emb.T,
                         precision=jax.lax.Precision.HIGHEST)
                 + params["b_ih"])                             # (V, 3H) f32

    # Tied output projection, vocab padded to a lane multiple; padded columns are 0.
    w_emb_T_pad = jnp.pad(params["w_emb"].T, ((0, 0), (0, Vpad - V)))   # (E, Vpad)

    # Pack the remaining small vectors into a single VMEM blob (one DMA instead of four).
    vecs = jnp.zeros((4, W), jnp.float32)
    vecs = vecs.at[0, :H].set(params["w_e"][0, :H])            # attention weight on hidden
    vecs = vecs.at[1, :H].set(params["w_e"][0, H:])            # attention weight on encoder
    vecs = vecs.at[2, :3 * H].set(params["b_hh"][0])           # GRU hidden bias
    vecs = vecs.at[3, :E].set(params["b_fc1"][0])              # fc1 bias

    return {
        "out_dim": V,
        "b_e": params["b_e"].reshape(1),                       # (1,) SMEM scalar
        "vecs": vecs,                                          # (4, W) f32
        "emb_gates": emb_gates,                                # (V, 3H) f32 (XLA-side gather)
        "w_ih_ctx_T": w_ih_ctx.T.astype(jnp.bfloat16),         # (H, 3H)
        "w_hh_T": params["w_hh"].T.astype(jnp.bfloat16),       # (H, 3H)
        "w_fc1_T": params["w_fc1"].T.astype(jnp.bfloat16),     # (H, E)
        "w_emb_T_pad": w_emb_T_pad.astype(jnp.bfloat16),       # (E, Vpad)
    }


def decoder_forward(tokens, encoder_states, hidden, prep):
    """tokens: (1, B) int32; encoder_states: (S, B, H); hidden: (1, B, H)."""
    S, B, H = encoder_states.shape
    E, Vpad = prep["w_emb_T_pad"].shape
    V = prep["out_dim"]
    Bp = ((B + 7) // 8) * 8                                    # sublane-dense batch

    tok = jnp.pad(tokens.reshape(B).astype(jnp.int32), (0, Bp - B))
    # Embedding gather + GRU input-gate/bias prefusion done XLA-side: (Bp, 3H).
    gi_emb = prep["emb_gates"][tok]

    enc_bsh = jnp.transpose(encoder_states, (1, 0, 2))         # (B, S, H): scores -> (B, S)
    enc_bsh = jnp.pad(enc_bsh, ((0, Bp - B), (0, 0), (0, 0)))  # (Bp, S, H)
    h0 = jnp.pad(hidden[0], ((0, Bp - B), (0, 0)))             # (Bp, H)

    smem = pl.BlockSpec(memory_space=pltpu.MemorySpace.SMEM)
    vmem = pl.BlockSpec(memory_space=pltpu.MemorySpace.VMEM)

    logits_pad, h_new = pl.pallas_call(
        decoder_kernel,
        out_shape=(jax.ShapeDtypeStruct((Bp, Vpad), jnp.float32),
                   jax.ShapeDtypeStruct((Bp, H), jnp.float32)),
        in_specs=[smem] + [vmem] * 8,
        out_specs=(vmem, vmem),
        # new hidden reuses the old hidden's buffer (input index 2 -> output index 1)
        input_output_aliases={2: 1},
        compiler_params=pltpu.CompilerParams(vmem_limit_bytes=32 * 1024 * 1024),
    )(prep["b_e"], enc_bsh, h0, prep["vecs"], gi_emb,
      prep["w_ih_ctx_T"], prep["w_hh_T"], prep["w_fc1_T"], prep["w_emb_T_pad"])

    # PyTorch: output.squeeze(0) -> (B, V); hidden stays (num_layers=1, B, H)
    return logits_pad[:B, :V], h_new[None, :B, :]


def decoder_reference(tokens, encoder_states, hidden, params):
    """Pure-JAX mirror of the PyTorch forward for validation."""
    h0 = hidden[0]                                             # (B, H)
    S, B, H = encoder_states.shape
    emb = params["w_emb"][tokens[0]]                           # (B, E)
    h_rep = jnp.broadcast_to(h0[None], (S, B, H))
    combined = jnp.concatenate([h_rep, encoder_states], axis=2)            # (S, B, 2H)
    e = jnp.maximum(combined @ params["w_e"].T + params["b_e"][0, 0], 0.0)
    attn = jax.nn.softmax(e, axis=0)                           # (S, B, 1) softmax over seq
    attn_bt = jnp.transpose(attn, (1, 2, 0))                   # (B, 1, S)
    enc_bt = jnp.transpose(encoder_states, (1, 0, 2))          # (B, S, H)
    ctx = jnp.einsum("bos,bsh->boh", attn_bt, enc_bt)[:, 0, :]             # (B, H)
    x = jnp.concatenate([ctx, emb], axis=-1)
    gi = x @ params["w_ih"].T + params["b_ih"]
    gh = h0 @ params["w_hh"].T + params["b_hh"]
    r = jax.nn.sigmoid(gi[:, :H] + gh[:, :H])
    z = jax.nn.sigmoid(gi[:, H:2 * H] + gh[:, H:2 * H])
    n = jnp.tanh(gi[:, 2 * H:] + r * gh[:, 2 * H:])
    h_new = (1.0 - z) * n + z * h0
    y1 = h_new @ params["w_fc1"].T + params["b_fc1"]
    logits = y1 @ params["w_emb"].T
    return logits, h_new[None]


if __name__ == "__main__":
    V, H, E, S, B = 24, 32, 16, 8, 2   # output_dim, hidden_dim, embedding_size, seq, batch

    key = jax.random.PRNGKey(0)
    ks = jax.random.split(key, 12)
    params = {
        "w_emb": 0.1 * jax.random.normal(ks[0], (V, E), jnp.float32),
        "w_e":   0.1 * jax.random.normal(ks[1], (1, 2 * H), jnp.float32),
        "b_e":   0.1 * jax.random.normal(ks[2], (1, 1), jnp.float32),
        "w_ih":  0.1 * jax.random.normal(ks[3], (3 * H, H + E), jnp.float32),
        "b_ih":  0.1 * jax.random.normal(ks[4], (1, 3 * H), jnp.float32),
        "w_hh":  0.1 * jax.random.normal(ks[5], (3 * H, H), jnp.float32),
        "b_hh":  0.1 * jax.random.normal(ks[6], (1, 3 * H), jnp.float32),
        "w_fc1": 0.1 * jax.random.normal(ks[7], (E, H), jnp.float32),
        "b_fc1": 0.1 * jax.random.normal(ks[8], (1, E), jnp.float32),
    }

    tokens = jax.random.randint(ks[9], (1, B), 0, V, dtype=jnp.int32)
    encoder_states = jax.random.normal(ks[10], (S, B, H), jnp.float32)
    hidden = jax.random.normal(ks[11], (1, B, H), jnp.float32)

    prep = prepare_params(params)
    logits, h_new = jax.block_until_ready(
        decoder_forward(tokens, encoder_states, hidden, prep))

    ref_logits, ref_h = decoder_reference(tokens, encoder_states, hidden, params)
    # Tolerance 2e-2: kernel matmul weights/operands are bf16 (f32 accumulate) vs. the
    # full-f32 plain-JAX reference; attention softmax itself is exact f32.
    np.testing.assert_allclose(np.asarray(logits), np.asarray(ref_logits),
                               rtol=2e-2, atol=2e-2)
    np.testing.assert_allclose(np.asarray(h_new), np.asarray(ref_h),
                               rtol=2e-2, atol=2e-2)
    print("KERNEL_OK")
</pallas_src>

<mosaic_0001>
module attributes {stable_mosaic.version = 11 : i64} {
  func.func @decoder_kernel(%arg0: memref<1xf32, #tpu.memory_space<smem>>, %arg1: memref<8x8x32xf32, #tpu.memory_space<vmem>>, %arg2: memref<8x32xf32, #tpu.memory_space<vmem>>, %arg3: memref<4x96xf32, #tpu.memory_space<vmem>>, %arg4: memref<8x96xf32, #tpu.memory_space<vmem>>, %arg5: memref<32x96xbf16, #tpu.memory_space<vmem>>, %arg6: memref<32x96xbf16, #tpu.memory_space<vmem>>, %arg7: memref<32x16xbf16, #tpu.memory_space<vmem>>, %arg8: memref<16x128xbf16, #tpu.memory_space<vmem>>, %arg9: memref<8x128xf32, #tpu.memory_space<vmem>>, %arg10: memref<8x32xf32, #tpu.memory_space<vmem>>) attributes {dimension_semantics = [], scalar_prefetch = 0 : i64, scratch_operands = 0 : i64, tpu.core_type = #tpu.core_type<tc>} {
    %c0 = arith.constant 0 : index
    %c0_0 = arith.constant 0 : index
    %c0_1 = arith.constant 0 : index
    %0 = vector.load %arg1[%c0, %c0_0, %c0_1] : memref<8x8x32xf32, #tpu.memory_space<vmem>>, vector<8x8x32xf32>
    %c0_2 = arith.constant 0 : index
    %c0_3 = arith.constant 0 : index
    %1 = vector.load %arg2[%c0_2, %c0_3] : memref<8x32xf32, #tpu.memory_space<vmem>>, vector<8x32xf32>
    %c0_4 = arith.constant 0 : index
    %c0_5 = arith.constant 0 : index
    %2 = vector.load %arg3[%c0_4, %c0_5] : memref<4x96xf32, #tpu.memory_space<vmem>>, vector<1x32xf32>
    %c1 = arith.constant 1 : index
    %c0_6 = arith.constant 0 : index
    %3 = vector.load %arg3[%c1, %c0_6] : memref<4x96xf32, #tpu.memory_space<vmem>>, vector<1x32xf32>
    %c2 = arith.constant 2 : index
    %c0_7 = arith.constant 0 : index
    %4 = vector.load %arg3[%c2, %c0_7] : memref<4x96xf32, #tpu.memory_space<vmem>>, vector<1x96xf32>
    %c3 = arith.constant 3 : index
    %c0_8 = arith.constant 0 : index
    %5 = vector.load %arg3[%c3, %c0_8] : memref<4x96xf32, #tpu.memory_space<vmem>>, vector<1x16xf32>
    %c0_9 = arith.constant 0 : index
    %6 = memref.load %arg0[%c0_9] : memref<1xf32, #tpu.memory_space<smem>>
    %7 = vector.broadcast %2 : vector<1x32xf32> to vector<8x32xf32>
    %8 = arith.mulf %1, %7 : vector<8x32xf32>
    %cst = arith.constant dense<0.000000e+00> : vector<8xf32>
    %9 = vector.multi_reduction <add>, %8, %cst [1] : vector<8x32xf32> to vector<8xf32>
    %10 = vector.shape_cast %9 : vector<8xf32> to vector<8x1xf32>
    %11 = vector.shape_cast %3 : vector<1x32xf32> to vector<1x1x32xf32>
    %12 = vector.broadcast %11 : vector<1x1x32xf32> to vector<8x8x32xf32>
    %13 = arith.mulf %0, %12 : vector<8x8x32xf32>
    %cst_10 = arith.constant dense<0.000000e+00> : vector<8x8xf32>
    %14 = vector.multi_reduction <add>, %13, %cst_10 [2] : vector<8x8x32xf32> to vector<8x8xf32>
    %15 = vector.broadcast %10 : vector<8x1xf32> to vector<8x8xf32>
    %16 = arith.addf %14, %15 : vector<8x8xf32>
    %17 = vector.broadcast %6 : f32 to vector<8x8xf32>
    %18 = arith.addf %16, %17 : vector<8x8xf32>
    %cst_11 = arith.constant 0.000000e+00 : f32
    %19 = vector.broadcast %cst_11 : f32 to vector<8x8xf32>
    %20 = arith.maximumf %18, %19 : vector<8x8xf32>
    %cst_12 = arith.constant dense<0xFF800000> : vector<8xf32>
    %21 = vector.multi_reduction <maximumf>, %20, %cst_12 [1] : vector<8x8xf32> to vector<8xf32>
    %22 = vector.shape_cast %21 : vector<8xf32> to vector<8x1xf32>
    %23 = vector.broadcast %22 : vector<8x1xf32> to vector<8x8xf32>
    %24 = arith.subf %20, %23 : vector<8x8xf32>
    %25 = math.exp %24 : vector<8x8xf32>
    %cst_13 = arith.constant dense<0.000000e+00> : vector<8xf32>
    %26 = vector.multi_reduction <add>, %25, %cst_13 [1] : vector<8x8xf32> to vector<8xf32>
    %27 = vector.shape_cast %26 : vector<8xf32> to vector<8x1xf32>
    %28 = vector.broadcast %27 : vector<8x1xf32> to vector<8x8xf32>
    %29 = arith.divf %25, %28 : vector<8x8xf32>
    %30 = vector.shape_cast %29 : vector<8x8xf32> to vector<8x8x1xf32>
    %31 = vector.broadcast %30 : vector<8x8x1xf32> to vector<8x8x32xf32>
    %32 = arith.mulf %31, %0 : vector<8x8x32xf32>
    %cst_14 = arith.constant dense<0.000000e+00> : vector<8x32xf32>
    %33 = vector.multi_reduction <add>, %32, %cst_14 [1] : vector<8x8x32xf32> to vector<8x32xf32>
    %34 = arith.truncf %33 : vector<8x32xf32> to vector<8x32xbf16>
    %c0_15 = arith.constant 0 : index
    %c0_16 = arith.constant 0 : index
    %35 = vector.load %arg5[%c0_15, %c0_16] : memref<32x96xbf16, #tpu.memory_space<vmem>>, vector<32x96xbf16>
    %cst_17 = arith.constant dense<0.000000e+00> : vector<8x96xf32>
    %36 = tpu.matmul %34, %35, %cst_17 {dimension_numbers = #tpu.dot_dimension_numbers<[1], [0], [0], [1], [0, 0, 1, 1], [], []>} : vector<8x32xbf16>, vector<32x96xbf16>, vector<8x96xf32> -> vector<8x96xf32>
    %c0_18 = arith.constant 0 : index
    %c0_19 = arith.constant 0 : index
    %37 = vector.load %arg4[%c0_18, %c0_19] : memref<8x96xf32, #tpu.memory_space<vmem>>, vector<8x96xf32>
    %38 = arith.addf %36, %37 : vector<8x96xf32>
    %39 = arith.truncf %1 : vector<8x32xf32> to vector<8x32xbf16>
    %c0_20 = arith.constant 0 : index
    %c0_21 = arith.constant 0 : index
    %40 = vector.load %arg6[%c0_20, %c0_21] : memref<32x96xbf16, #tpu.memory_space<vmem>>, vector<32x96xbf16>
    %cst_22 = arith.constant dense<0.000000e+00> : vector<8x96xf32>
    %41 = tpu.matmul %39, %40, %cst_22 {dimension_numbers = #tpu.dot_dimension_numbers<[1], [0], [0], [1], [0, 0, 1, 1], [], []>} : vector<8x32xbf16>, vector<32x96xbf16>, vector<8x96xf32> -> vector<8x96xf32>
    %42 = vector.broadcast %4 : vector<1x96xf32> to vector<8x96xf32>
    %43 = arith.addf %41, %42 : vector<8x96xf32>
    %44 = vector.extract_strided_slice %38 {offsets = [0, 0], sizes = [8, 32], strides = [1, 1]} : vector<8x96xf32> to vector<8x32xf32>
    %45 = vector.extract_strided_slice %43 {offsets = [0, 0], sizes = [8, 32], strides = [1, 1]} : vector<8x96xf32> to vector<8x32xf32>
    %46 = arith.addf %44, %45 : vector<8x32xf32>
    %47 = arith.negf %46 : vector<8x32xf32>
    %48 = math.exp %47 : vector<8x32xf32>
    %cst_23 = arith.constant 1.000000e+00 : f32
    %49 = vector.broadcast %cst_23 : f32 to vector<8x32xf32>
    %50 = arith.addf %49, %48 : vector<8x32xf32>
    %51 = arith.divf %49, %50 : vector<8x32xf32>
    %52 = vector.extract_strided_slice %38 {offsets = [0, 32], sizes = [8, 32], strides = [1, 1]} : vector<8x96xf32> to vector<8x32xf32>
    %53 = vector.extract_strided_slice %43 {offsets = [0, 32], sizes = [8, 32], strides = [1, 1]} : vector<8x96xf32> to vector<8x32xf32>
    %54 = arith.addf %52, %53 : vector<8x32xf32>
    %55 = arith.negf %54 : vector<8x32xf32>
    %56 = math.exp %55 : vector<8x32xf32>
    %cst_24 = arith.constant 1.000000e+00 : f32
    %57 = vector.broadcast %cst_24 : f32 to vector<8x32xf32>
    %58 = arith.addf %57, %56 : vector<8x32xf32>
    %59 = arith.divf %57, %58 : vector<8x32xf32>
    %60 = vector.extract_strided_slice %38 {offsets = [0, 64], sizes = [8, 32], strides = [1, 1]} : vector<8x96xf32> to vector<8x32xf32>
    %61 = vector.extract_strided_slice %43 {offsets = [0, 64], sizes = [8, 32], strides = [1, 1]} : vector<8x96xf32> to vector<8x32xf32>
    %62 = arith.mulf %51, %61 : vector<8x32xf32>
    %63 = arith.addf %60, %62 : vector<8x32xf32>
    %64 = math.tanh %63 : vector<8x32xf32>
    %cst_25 = arith.constant 1.000000e+00 : f32
    %65 = vector.broadcast %cst_25 : f32 to vector<8x32xf32>
    %66 = arith.subf %65, %59 : vector<8x32xf32>
    %67 = arith.mulf %66, %64 : vector<8x32xf32>
    %68 = arith.mulf %59, %1 : vector<8x32xf32>
    %69 = arith.addf %67, %68 : vector<8x32xf32>
    %70 = arith.truncf %69 : vector<8x32xf32> to vector<8x32xbf16>
    %c0_26 = arith.constant 0 : index
    %c0_27 = arith.constant 0 : index
    %71 = vector.load %arg7[%c0_26, %c0_27] : memref<32x16xbf16, #tpu.memory_space<vmem>>, vector<32x16xbf16>
    %cst_28 = arith.constant dense<0.000000e+00> : vector<8x16xf32>
    %72 = tpu.matmul %70, %71, %cst_28 {dimension_numbers = #tpu.dot_dimension_numbers<[1], [0], [0], [1], [0, 0, 1, 1], [], []>} : vector<8x32xbf16>, vector<32x16xbf16>, vector<8x16xf32> -> vector<8x16xf32>
    %73 = vector.broadcast %5 : vector<1x16xf32> to vector<8x16xf32>
    %74 = arith.addf %72, %73 : vector<8x16xf32>
    %75 = arith.truncf %74 : vector<8x16xf32> to vector<8x16xbf16>
    %c0_29 = arith.constant 0 : index
    %c0_30 = arith.constant 0 : index
    %76 = vector.load %arg8[%c0_29, %c0_30] : memref<16x128xbf16, #tpu.memory_space<vmem>>, vector<16x128xbf16>
    %cst_31 = arith.constant dense<0.000000e+00> : vector<8x128xf32>
    %77 = tpu.matmul %75, %76, %cst_31 {dimension_numbers = #tpu.dot_dimension_numbers<[1], [0], [0], [1], [0, 0, 1, 1], [], []>} : vector<8x16xbf16>, vector<16x128xbf16>, vector<8x128xf32> -> vector<8x128xf32>
    %c0_32 = arith.constant 0 : index
    %c0_33 = arith.constant 0 : index
    %78 = vector.load %arg9[%c0_32, %c0_33] : memref<8x128xf32, #tpu.memory_space<vmem>>, vector<8x128xf32>
    tpu.vector_store %arg9[%c0_32, %c0_33], %77 {strides = array<i32>} : memref<8x128xf32, #tpu.memory_space<vmem>>, vector<8x128xf32>,
    %c0_34 = arith.constant 0 : index
    %c0_35 = arith.constant 0 : index
    %79 = vector.load %arg10[%c0_34, %c0_35] : memref<8x32xf32, #tpu.memory_space<vmem>>, vector<8x32xf32>
    tpu.vector_store %arg10[%c0_34, %c0_35], %69 {strides = array<i32>} : memref<8x32xf32, #tpu.memory_space<vmem>>, vector<8x32xf32>,
    return
  }
}

</mosaic_0001>

<llo_original>
// kernel: tpu_custom_call.1
$region0: #{tpu_custom_call.1}
  #allocation0 [shape = 'u32[]', space=smem, size = 0x4, offset = 0x4, fixed_abs, tag = 'smem constant byte address 0x4 - core index']
  #allocation1 [shape = 'u32[144,128]{1,0:T(1,128)}', space=vmem, size = 0x12000, scoped, tag = 'internal scratch']
  #allocation2 [shape = 'f32[1]{0:T(128)S(6)}', space=smem, size = 0x200, scoped, tag = 'scoped memory for tpu_custom_call.1']
  %s0 = inlined_call_operand.<no memory space> [shape: f32[1], index: 0, kind: input, shape index: {}]
  %s1 = inlined_call_operand.hbm [shape: f32[8,8,32], index: 1, kind: input, shape index: {}]
  %s2 = inlined_call_operand.hbm [shape: f32[8,32], index: 2, kind: input, shape index: {}, may-alias: {2,10}]
  %s3 = inlined_call_operand.vmem [shape: f32[4,96], index: 3, kind: input, shape index: {}]
  %s4 = inlined_call_operand.hbm [shape: f32[8,96], index: 4, kind: input, shape index: {}]
  %s5 = inlined_call_operand.vmem [shape: bf16[32,96], index: 5, kind: input, shape index: {}]
  %s6 = inlined_call_operand.vmem [shape: bf16[32,96], index: 6, kind: input, shape index: {}]
  %s7 = inlined_call_operand.vmem [shape: bf16[32,16], index: 7, kind: input, shape index: {}]
  %s8 = inlined_call_operand.hbm [shape: bf16[16,128], index: 8, kind: input, shape index: {}]
  %s9 = inlined_call_operand.hbm [shape: f32[8,128], index: 9, kind: output, shape index: {0}]
  %s10 = inlined_call_operand.hbm [shape: f32[8,32], index: 10, kind: output, shape index: {1}, may-alias: {2,10}]
  %11 = xla_tuple %s9, %s10
  %s12 = sld [smem:[#allocation0]]
  $region70: #{tpu_custom_call.1} parent=0
    _
  %s14 = ssub.s32 1, %s12
  %s15 = scalar_select 0, %s14, %s12
  %16 = sst [smem:[#allocation2]] %s0
  $region1: #{tpu_custom_call.1} parent=0
    #allocation3 [shape = 'u8[32768]{0}', space=vmem, size = 0x8000, scoped, tag = 'input window, operand 1, single buffered']
    #allocation4 [shape = 's32[1]{0}', space=sflag, size = 0x4, scoped, tag = 'scoped memory for tpu_custom_call.1']
    #allocation5 [shape = 's32[1]{0}', space=sflag, size = 0x4, scoped, tag = 'scoped memory for tpu_custom_call.1']
    #allocation6 [shape = 'u8[4096]{0}', space=vmem, size = 0x1000, scoped, tag = 'input window, operand 2, single buffered']
    #allocation7 [shape = 's32[1]{0}', space=sflag, size = 0x4, scoped, tag = 'scoped memory for tpu_custom_call.1']
    #allocation8 [shape = 'u8[4096]{0}', space=vmem, size = 0x1000, scoped, tag = 'input window, operand 4, single buffered']
    #allocation9 [shape = 'u8[4096]{0}', space=vmem, size = 0x1000, scoped, tag = 'input window, operand 8, single buffered']
    #allocation10 [shape = 's32[1]{0}', space=sflag, size = 0x4, scoped, tag = 'scoped memory for tpu_custom_call.1']
    #allocation11 [shape = 'u8[4096]{0}', space=vmem, size = 0x1000, scoped, tag = 'output window, operand 0, single buffered']
    #allocation12 [shape = 'u8[4096]{0}', space=vmem, size = 0x1000, scoped, tag = 'output window, operand 1, single buffered']
    #allocation13 [shape = 's32[1]{0}', space=sflag, size = 0x4, scoped, tag = 'scoped memory for tpu_custom_call.1']
    %17 = vsyncpa [#allocation4], 0
    %18 = vsyncpa [#allocation7], 0
    %19 = vsyncpa [#allocation10], 0
    %20 = vsyncpa [#allocation5], 0
    %21 = vsyncpa [#allocation13], 0
    // Predicated region
    $region2: #{tpu_custom_call.1} parent=1 // pred_check
      _
    $region3: #{tpu_custom_call.1} parent=1 // pred_check_branch
      %23 = sbr.rel (0) target = $region5
    $region4: #{tpu_custom_call.1} parent=1 // pred_region
      _
    $region5: #{tpu_custom_call.1} parent=1 // pred_fallthru
      _
    // Predicated region
    $region6: #{tpu_custom_call.1} parent=1 // pred_check
      _
    $region7: #{tpu_custom_call.1} parent=1 // pred_check_branch
      %25 = sbr.rel (0) target = $region9
    $region8: #{tpu_custom_call.1} parent=1 // pred_region
      %s27 = ssub.s32 1024, 1024
      %28 = vsyncadd [#allocation4], %s27
      %s29 = sshll.u32 [#allocation3], 4
      %s30 = int_to_ptr.vmem [resolvable:$true] %s29
      %35 = dma.hbm_to_vmem [thread:$0]  %s1, 1024, %s30, [#allocation4], 128, 128, 8
    $region9: #{tpu_custom_call.1} parent=1 // pred_fallthru
      _
    // Predicated region
    $region10: #{tpu_custom_call.1} parent=1 // pred_check
      _
    $region11: #{tpu_custom_call.1} parent=1 // pred_check_branch
      %37 = sbr.rel (0) target = $region13
    $region12: #{tpu_custom_call.1} parent=1 // pred_region
      %s39 = ssub.s32 128, 128
      %40 = vsyncadd [#allocation7], %s39
      %s42 = sshll.u32 [#allocation6], 4
      %s43 = int_to_ptr.vmem [resolvable:$true] %s42
      %45 = dma.hbm_to_vmem [thread:$0]  %s2, 128, %s43, [#allocation7]
    $region13: #{tpu_custom_call.1} parent=1 // pred_fallthru
      _
    // Predicated region
    $region14: #{tpu_custom_call.1} parent=1 // pred_check
      _
    $region15: #{tpu_custom_call.1} parent=1 // pred_check_branch
      %47 = sbr.rel (0) target = $region17
    $region16: #{tpu_custom_call.1} parent=1 // pred_region
      _
    $region17: #{tpu_custom_call.1} parent=1 // pred_fallthru
      _
    // Predicated region
    $region18: #{tpu_custom_call.1} parent=1 // pred_check
      _
    $region19: #{tpu_custom_call.1} parent=1 // pred_check_branch
      %49 = sbr.rel (0) target = $region21
    $region20: #{tpu_custom_call.1} parent=1 // pred_region
      %s51 = ssub.s32 128, 128
      %52 = vsyncadd [#allocation7], %s51
      %s54 = sshll.u32 [#allocation8], 4
      %s55 = int_to_ptr.vmem [resolvable:$true] %s54
      %57 = dma.hbm_to_vmem [thread:$0]  %s4, 128, %s55, [#allocation7]
    $region21: #{tpu_custom_call.1} parent=1 // pred_fallthru
      _
    // Predicated region
    $region22: #{tpu_custom_call.1} parent=1 // pred_check
      _
    $region23: #{tpu_custom_call.1} parent=1 // pred_check_branch
      %59 = sbr.rel (0) target = $region25
    $region24: #{tpu_custom_call.1} parent=1 // pred_region
      _
    $region25: #{tpu_custom_call.1} parent=1 // pred_fallthru
      _
    // Predicated region
    $region26: #{tpu_custom_call.1} parent=1 // pred_check
      _
    $region27: #{tpu_custom_call.1} parent=1 // pred_check_branch
      %61 = sbr.rel (0) target = $region29
    $region28: #{tpu_custom_call.1} parent=1 // pred_region
      _
    $region29: #{tpu_custom_call.1} parent=1 // pred_fallthru
      _
    // Predicated region
    $region30: #{tpu_custom_call.1} parent=1 // pred_check
      _
    $region31: #{tpu_custom_call.1} parent=1 // pred_check_branch
      %63 = sbr.rel (0) target = $region33
    $region32: #{tpu_custom_call.1} parent=1 // pred_region
      _
    $region33: #{tpu_custom_call.1} parent=1 // pred_fallthru
      _
    // Predicated region
    $region34: #{tpu_custom_call.1} parent=1 // pred_check
      _
    $region35: #{tpu_custom_call.1} parent=1 // pred_check_branch
      %65 = sbr.rel (0) target = $region37
    $region36: #{tpu_custom_call.1} parent=1 // pred_region
      %s67 = ssub.s32 128, 128
      %68 = vsyncadd [#allocation10], %s67
      %s69 = sshll.u32 [#allocation9], 4
      %s70 = int_to_ptr.vmem [resolvable:$true] %s69
      %75 = dma.hbm_to_vmem [thread:$0]  %s8, 128, %s70, [#allocation10], 64, 64, 4
    $region37: #{tpu_custom_call.1} parent=1 // pred_fallthru
      _
    // Predicated region
    $region38: #{tpu_custom_call.1} parent=1 // pred_check
      _
    $region39: #{tpu_custom_call.1} parent=1 // pred_check_branch
      %77 = sbr.rel (0) target = $region41
    $region40: #{tpu_custom_call.1} parent=1 // pred_region
      %78 = dma.done [#allocation4], 1024
    $region41: #{tpu_custom_call.1} parent=1 // pred_fallthru
      _
    // Predicated region
    $region42: #{tpu_custom_call.1} parent=1 // pred_check
      _
    $region43: #{tpu_custom_call.1} parent=1 // pred_check_branch
      %80 = sbr.rel (0) target = $region45
    $region44: #{tpu_custom_call.1} parent=1 // pred_region
      %81 = dma.done [#allocation7], 128
    $region45: #{tpu_custom_call.1} parent=1 // pred_fallthru
      _
    // Predicated region
    $region46: #{tpu_custom_call.1} parent=1 // pred_check
      _
    $region47: #{tpu_custom_call.1} parent=1 // pred_check_branch
      %83 = sbr.rel (0) target = $region49
    $region48: #{tpu_custom_call.1} parent=1 // pred_region
      %84 = dma.done [#allocation7], 128
    $region49: #{tpu_custom_call.1} parent=1 // pred_fallthru
      _
    // Predicated region
    $region50: #{tpu_custom_call.1} parent=1 // pred_check
      _
    $region51: #{tpu_custom_call.1} parent=1 // pred_check_branch
      %86 = sbr.rel (0) target = $region53
    $region52: #{tpu_custom_call.1} parent=1 // pred_region
      %87 = dma.done [#allocation10], 128
    $region53: #{tpu_custom_call.1} parent=1 // pred_fallthru
      _
    %v89 = vld [vmem:[#allocation3] sm:$0xff]
    %v90 = vld [vmem:[#allocation3 + $0x8] sm:$0xff]
    %v91 = vld [vmem:[#allocation3 + $0x10] sm:$0xff]
    %v92 = vld [vmem:[#allocation3 + $0x18] sm:$0xff]
    %v93 = vld [vmem:[#allocation3 + $0x20] sm:$0xff]
    %v94 = vld [vmem:[#allocation3 + $0x28] sm:$0xff]
    %v95 = vld [vmem:[#allocation3 + $0x30] sm:$0xff]
    %v96 = vld [vmem:[#allocation3 + $0x38] sm:$0xff]
    %v97 = vld [vmem:[#allocation6] sm:$0xff]
    %v98 = vld [vmem:[%s3] sm:$0x1]
    %v99 = vld [vmem:[%s3 + $0x1] sm:$0x1]
    %v100 = vld [vmem:[%s3 + $0x2] sm:$0x1]
    %v101 = vld [vmem:[%s3 + $0x3] sm:$0x1]
    %s102 = sld [smem:[#allocation2]]
    %v103 = vlaneseq
    %v104 = vshrl.u32 %v103, 7
    %v105 = vsub.s32 0, %v104
    %v106 = vrot.slane %v98, %v105
    %v107 = vmul.f32 %v97, %v106
    %vm108 = vcmask 261120
    %v109 = vsel %vm108, %v107, 0.0
    %110 = vadd.xlane.f32.xlu0 %v109
    %v111 = vpop.xlane.xlu0 %110
    %v112 = vlaneseq
    %v113 = vshrl.u32 %v112, 7
    %v114 = vsub.s32 0, %v113
    %v115 = vrot.slane %v99, %v114
    %v116 = vmul.f32 %v89, %v115
    %v117 = vmul.f32 %v90, %v115
    %v118 = vmul.f32 %v91, %v115
    %v119 = vmul.f32 %v92, %v115
    %v120 = vmul.f32 %v93, %v115
    %v121 = vmul.f32 %v94, %v115
    %v122 = vmul.f32 %v95, %v115
    %v123 = vmul.f32 %v96, %v115
    %v124 = vsel %vm108, %v116, 0.0
    %125 = vadd.xlane.f32.xlu0 %v124
    %v126 = vpop.xlane.xlu0 %125
    %v127 = vsel %vm108, %v117, 0.0
    %128 = vadd.xlane.f32.xlu0 %v127
    %v129 = vpop.xlane.xlu0 %128
    %v130 = vsel %vm108, %v118, 0.0
    %131 = vadd.xlane.f32.xlu0 %v130
    %v132 = vpop.xlane.xlu0 %131
    %v133 = vsel %vm108, %v119, 0.0
    %134 = vadd.xlane.f32.xlu0 %v133
    %v135 = vpop.xlane.xlu0 %134
    %v136 = vsel %vm108, %v120, 0.0
    %137 = vadd.xlane.f32.xlu0 %v136
    %v138 = vpop.xlane.xlu0 %137
    %v139 = vsel %vm108, %v121, 0.0
    %140 = vadd.xlane.f32.xlu0 %v139
    %v141 = vpop.xlane.xlu0 %140
    %v142 = vsel %vm108, %v122, 0.0
    %143 = vadd.xlane.f32.xlu0 %v142
    %v144 = vpop.xlane.xlu0 %143
    %v145 = vsel %vm108, %v123, 0.0
    %146 = vadd.xlane.f32.xlu0 %v145
    %v147 = vpop.xlane.xlu0 %146
    %v149 = vlaneseq
    %v150 = vshrl.u32 %v149, 7
    %v151 = vsub.s32 0, %v150
    %v152 = vrot.slane %v111, %v151
    %v153 = vlaneseq
    %v154 = vshrl.u32 %v153, 7
    %v155 = vsub.s32 1, %v154
    %v156 = vrot.slane %v111, %v155
    %v157 = vlaneseq
    %v158 = vshrl.u32 %v157, 7
    %v159 = vsub.s32 2, %v158
    %v160 = vrot.slane %v111, %v159
    %v161 = vlaneseq
    %v162 = vshrl.u32 %v161, 7
    %v163 = vsub.s32 3, %v162
    %v164 = vrot.slane %v111, %v163
    %v165 = vlaneseq
    %v166 = vshrl.u32 %v165, 7
    %v167 = vsub.s32 4, %v166
    %v168 = vrot.slane %v111, %v167
    %v169 = vlaneseq
    %v170 = vshrl.u32 %v169, 7
    %v171 = vsub.s32 5, %v170
    %v172 = vrot.slane %v111, %v171
    %v173 = vlaneseq
    %v174 = vshrl.u32 %v173, 7
    %v175 = vsub.s32 6, %v174
    %v176 = vrot.slane %v111, %v175
    %v177 = vlaneseq
    %v178 = vshrl.u32 %v177, 7
    %v179 = vsub.s32 7, %v178
    %v180 = vrot.slane %v111, %v179
    %v189 = vadd.f32 %v126, %v152
    %v190 = vadd.f32 %v129, %v156
    %v191 = vadd.f32 %v132, %v160
    %v192 = vadd.f32 %v135, %v164
    %v193 = vadd.f32 %v138, %v168
    %v194 = vadd.f32 %v141, %v172
    %v195 = vadd.f32 %v144, %v176
    %v196 = vadd.f32 %v147, %v180
    %v197 = vstv %s102
    %v198 = vadd.f32 %v189, %v197
    %v199 = vadd.f32 %v190, %v197
    %v200 = vadd.f32 %v191, %v197
    %v201 = vadd.f32 %v192, %v197
    %v202 = vadd.f32 %v193, %v197
    %v203 = vadd.f32 %v194, %v197
    %v204 = vadd.f32 %v195, %v197
    %v205 = vadd.f32 %v196, %v197
    %v206 = vmax.f32 %v198, 0.0
    %v207 = vmax.f32 %v199, 0.0
    %v208 = vmax.f32 %v200, 0.0
    %v209 = vmax.f32 %v201, 0.0
    %v210 = vmax.f32 %v202, 0.0
    %v211 = vmax.f32 %v203, 0.0
    %v212 = vmax.f32 %v204, 0.0
    %v213 = vmax.f32 %v205, 0.0
    %222 = vset.pattern.permute.xlu0 0
    %223 = vperm.xlu0 %222, %v206
    %v224 = vpop.permute.xlu0 %223
    %225 = vset.pattern.permute.xlu0 0
    %226 = vperm.xlu0 %225, %v207
    %v227 = vpop.permute.xlu0 %226
    %228 = vset.pattern.permute.xlu0 0
    %229 = vperm.xlu0 %228, %v208
    %v230 = vpop.permute.xlu0 %229
    %231 = vset.pattern.permute.xlu0 0
    %232 = vperm.xlu0 %231, %v209
    %v233 = vpop.permute.xlu0 %232
    %234 = vset.pattern.permute.xlu0 0
    %235 = vperm.xlu0 %234, %v210
    %v236 = vpop.permute.xlu0 %235
    %237 = vset.pattern.permute.xlu0 0
    %238 = vperm.xlu0 %237, %v211
    %v239 = vpop.permute.xlu0 %238
    %240 = vset.pattern.permute.xlu0 0
    %241 = vperm.xlu0 %240, %v212
    %v242 = vpop.permute.xlu0 %241
    %243 = vset.pattern.permute.xlu0 0
    %244 = vperm.xlu0 %243, %v213
    %v245 = vpop.permute.xlu0 %244
    %v246 = vlaneseq
    %v247 = vand.u32 %v246, 127
    %v248 = vlaneseq
    %v249 = vshrl.u32 %v248, 7
    %v250 = vsub.s32 %v247, %v249
    %v251 = vrot.slane %v224, %v250
    %v252 = vlaneseq
    %v253 = vshrl.u32 %v252, 7
    %v254 = vsub.s32 %v247, %v253
    %v255 = vrot.slane %v227, %v254
    %v256 = vlaneseq
    %v257 = vshrl.u32 %v256, 7
    %v258 = vsub.s32 %v247, %v257
    %v259 = vrot.slane %v230, %v258
    %v260 = vlaneseq
    %v261 = vshrl.u32 %v260, 7
    %v262 = vsub.s32 %v247, %v261
    %v263 = vrot.slane %v233, %v262
    %v264 = vlaneseq
    %v265 = vshrl.u32 %v264, 7
    %v266 = vsub.s32 %v247, %v265
    %v267 = vrot.slane %v236, %v266
    %v268 = vlaneseq
    %v269 = vshrl.u32 %v268, 7
    %v270 = vsub.s32 %v247, %v269
    %v271 = vrot.slane %v239, %v270
    %v272 = vlaneseq
    %v273 = vshrl.u32 %v272, 7
    %v274 = vsub.s32 %v247, %v273
    %v275 = vrot.slane %v242, %v274
    %v276 = vlaneseq
    %v277 = vshrl.u32 %v276, 7
    %v278 = vsub.s32 %v247, %v277
    %v279 = vrot.slane %v245, %v278
    %vm280 = vcmask 1041409
    %v281 = vsel %vm280, %v255, %v251
    %vm282 = vcmask 1042434
    %v283 = vsel %vm282, %v259, %v281
    %vm284 = vcmask 1043459
    %v285 = vsel %vm284, %v263, %v283
    %vm286 = vcmask 1044484
    %v287 = vsel %vm286, %v267, %v285
    %vm288 = vcmask 1045509
    %v289 = vsel %vm288, %v271, %v287
    %vm290 = vcmask 1046534
    %v291 = vsel %vm290, %v275, %v289
    %vm292 = vcmask 1047559
    %v293 = vsel %vm292, %v279, %v291
    %vm295 = vcmask 64512
    %v296 = vsel %vm295, %v293, -inf
    %297 = vmax.xlane.f32.xlu0 %v296
    %v298 = vpop.xlane.xlu0 %297
    %v300 = vlaneseq
    %v301 = vshrl.u32 %v300, 7
    %v302 = vsub.s32 0, %v301
    %v303 = vrot.slane %v298, %v302
    %v304 = vlaneseq
    %v305 = vshrl.u32 %v304, 7
    %v306 = vsub.s32 1, %v305
    %v307 = vrot.slane %v298, %v306
    %v308 = vlaneseq
    %v309 = vshrl.u32 %v308, 7
    %v310 = vsub.s32 2, %v309
    %v311 = vrot.slane %v298, %v310
    %v312 = vlaneseq
    %v313 = vshrl.u32 %v312, 7
    %v314 = vsub.s32 3, %v313
    %v315 = vrot.slane %v298, %v314
    %v316 = vlaneseq
    %v317 = vshrl.u32 %v316, 7
    %v318 = vsub.s32 4, %v317
    %v319 = vrot.slane %v298, %v318
    %v320 = vlaneseq
    %v321 = vshrl.u32 %v320, 7
    %v322 = vsub.s32 5, %v321
    %v323 = vrot.slane %v298, %v322
    %v324 = vlaneseq
    %v325 = vshrl.u32 %v324, 7
    %v326 = vsub.s32 6, %v325
    %v327 = vrot.slane %v298, %v326
    %v328 = vlaneseq
    %v329 = vshrl.u32 %v328, 7
    %v330 = vsub.s32 7, %v329
    %v331 = vrot.slane %v298, %v330
    %v340 = vsub.f32 %v206, %v303
    %v341 = vsub.f32 %v207, %v307
    %v342 = vsub.f32 %v208, %v311
    %v343 = vsub.f32 %v209, %v315
    %v344 = vsub.f32 %v210, %v319
    %v345 = vsub.f32 %v211, %v323
    %v346 = vsub.f32 %v212, %v327
    %v347 = vsub.f32 %v213, %v331
    %v348 = vmul.f32 %v340, 1.442695
    %v349 = vpow.pop %v348
    %v350 = vmul.f32 %v341, 1.442695
    %v351 = vpow.pop %v350
    %v352 = vmul.f32 %v342, 1.442695
    %v353 = vpow.pop %v352
    %v354 = vmul.f32 %v343, 1.442695
    %v355 = vpow.pop %v354
    %v356 = vmul.f32 %v344, 1.442695
    %v357 = vpow.pop %v356
    %v358 = vmul.f32 %v345, 1.442695
    %v359 = vpow.pop %v358
    %v360 = vmul.f32 %v346, 1.442695
    %v361 = vpow.pop %v360
    %v362 = vmul.f32 %v347, 1.442695
    %v363 = vpow.pop %v362
    %372 = vset.pattern.permute.xlu0 0
    %373 = vperm.xlu0 %372, %v349
    %v374 = vpop.permute.xlu0 %373
    %375 = vset.pattern.permute.xlu0 0
    %376 = vperm.xlu0 %375, %v351
    %v377 = vpop.permute.xlu0 %376
    %378 = vset.pattern.permute.xlu0 0
    %379 = vperm.xlu0 %378, %v353
    %v380 = vpop.permute.xlu0 %379
    %381 = vset.pattern.permute.xlu0 0
    %382 = vperm.xlu0 %381, %v355
    %v383 = vpop.permute.xlu0 %382
    %384 = vset.pattern.permute.xlu0 0
    %385 = vperm.xlu0 %384, %v357
    %v386 = vpop.permute.xlu0 %385
    %387 = vset.pattern.permute.xlu0 0
    %388 = vperm.xlu0 %387, %v359
    %v389 = vpop.permute.xlu0 %388
    %390 = vset.pattern.permute.xlu0 0
    %391 = vperm.xlu0 %390, %v361
    %v392 = vpop.permute.xlu0 %391
    %393 = vset.pattern.permute.xlu0 0
    %394 = vperm.xlu0 %393, %v363
    %v395 = vpop.permute.xlu0 %394
    %v396 = vlaneseq
    %v397 = vshrl.u32 %v396, 7
    %v398 = vsub.s32 %v247, %v397
    %v399 = vrot.slane %v374, %v398
    %v400 = vlaneseq
    %v401 = vshrl.u32 %v400, 7
    %v402 = vsub.s32 %v247, %v401
    %v403 = vrot.slane %v377, %v402
    %v404 = vlaneseq
    %v405 = vshrl.u32 %v404, 7
    %v406 = vsub.s32 %v247, %v405
    %v407 = vrot.slane %v380, %v406
    %v408 = vlaneseq
    %v409 = vshrl.u32 %v408, 7
    %v410 = vsub.s32 %v247, %v409
    %v411 = vrot.slane %v383, %v410
    %v412 = vlaneseq
    %v413 = vshrl.u32 %v412, 7
    %v414 = vsub.s32 %v247, %v413
    %v415 = vrot.slane %v386, %v414
    %v416 = vlaneseq
    %v417 = vshrl.u32 %v416, 7
    %v418 = vsub.s32 %v247, %v417
    %v419 = vrot.slane %v389, %v418
    %v420 = vlaneseq
    %v421 = vshrl.u32 %v420, 7
    %v422 = vsub.s32 %v247, %v421
    %v423 = vrot.slane %v392, %v422
    %v424 = vlaneseq
    %v425 = vshrl.u32 %v424, 7
    %v426 = vsub.s32 %v247, %v425
    %v427 = vrot.slane %v395, %v426
    %v428 = vsel %vm280, %v403, %v399
    %v429 = vsel %vm282, %v407, %v428
    %v430 = vsel %vm284, %v411, %v429
    %v431 = vsel %vm286, %v415, %v430
    %v432 = vsel %vm288, %v419, %v431
    %v433 = vsel %vm290, %v423, %v432
    %v434 = vsel %vm292, %v427, %v433
    %v436 = vsel %vm295, %v434, 0.0
    %437 = vadd.xlane.f32.xlu0 %v436
    %v438 = vpop.xlane.xlu0 %437
    %v440 = vlaneseq
    %v441 = vshrl.u32 %v440, 7
    %v442 = vsub.s32 0, %v441
    %v443 = vrot.slane %v438, %v442
    %v444 = vlaneseq
    %v445 = vshrl.u32 %v444, 7
    %v446 = vsub.s32 1, %v445
    %v447 = vrot.slane %v438, %v446
    %v448 = vlaneseq
    %v449 = vshrl.u32 %v448, 7
    %v450 = vsub.s32 2, %v449
    %v451 = vrot.slane %v438, %v450
    %v452 = vlaneseq
    %v453 = vshrl.u32 %v452, 7
    %v454 = vsub.s32 3, %v453
    %v455 = vrot.slane %v438, %v454
    %v456 = vlaneseq
    %v457 = vshrl.u32 %v456, 7
    %v458 = vsub.s32 4, %v457
    %v459 = vrot.slane %v438, %v458
    %v460 = vlaneseq
    %v461 = vshrl.u32 %v460, 7
    %v462 = vsub.s32 5, %v461
    %v463 = vrot.slane %v438, %v462
    %v464 = vlaneseq
    %v465 = vshrl.u32 %v464, 7
    %v466 = vsub.s32 6, %v465
    %v467 = vrot.slane %v438, %v466
    %v468 = vlaneseq
    %v469 = vshrl.u32 %v468, 7
    %v470 = vsub.s32 7, %v469
    %v471 = vrot.slane %v438, %v470
    %v480 = vrcp.pop %v443
    %v481 = vmul.f32 %v349, %v480
    %v482 = vrcp.pop %v447
    %v483 = vmul.f32 %v351, %v482
    %v484 = vrcp.pop %v451
    %v485 = vmul.f32 %v353, %v484
    %v486 = vrcp.pop %v455
    %v487 = vmul.f32 %v355, %v486
    %v488 = vrcp.pop %v459
    %v489 = vmul.f32 %v357, %v488
    %v490 = vrcp.pop %v463
    %v491 = vmul.f32 %v359, %v490
    %v492 = vrcp.pop %v467
    %v493 = vmul.f32 %v361, %v492
    %v494 = vrcp.pop %v471
    %v495 = vmul.f32 %v363, %v494
    %497 = vset.pattern.permute.xlu0 0
    %498 = vperm.xlu0 %497, %v481
    %v499 = vpop.permute.xlu0 %498
    %502 = vset.pattern.permute.xlu0 0
    %503 = vperm.xlu0 %502, %v483
    %v504 = vpop.permute.xlu0 %503
    %507 = vset.pattern.permute.xlu0 0
    %508 = vperm.xlu0 %507, %v485
    %v509 = vpop.permute.xlu0 %508
    %512 = vset.pattern.permute.xlu0 0
    %513 = vperm.xlu0 %512, %v487
    %v514 = vpop.permute.xlu0 %513
    %517 = vset.pattern.permute.xlu0 0
    %518 = vperm.xlu0 %517, %v489
    %v519 = vpop.permute.xlu0 %518
    %522 = vset.pattern.permute.xlu0 0
    %523 = vperm.xlu0 %522, %v491
    %v524 = vpop.permute.xlu0 %523
    %527 = vset.pattern.permute.xlu0 0
    %528 = vperm.xlu0 %527, %v493
    %v529 = vpop.permute.xlu0 %528
    %532 = vset.pattern.permute.xlu0 0
    %533 = vperm.xlu0 %532, %v495
    %v534 = vpop.permute.xlu0 %533
    %v536 = vmul.f32 %v499, %v89
    %v537 = vmul.f32 %v504, %v90
    %v538 = vmul.f32 %v509, %v91
    %v539 = vmul.f32 %v514, %v92
    %v540 = vmul.f32 %v519, %v93
    %v541 = vmul.f32 %v524, %v94
    %v542 = vmul.f32 %v529, %v95
    %v543 = vmul.f32 %v534, %v96
    %v544 = vsel %vm108, %v536, 0.0
    %v545 = vrot.slane %v544, 4
    %v546 = vadd.f32 %v544, %v545
    %v547 = vrot.slane %v546, 2
    %v548 = vadd.f32 %v546, %v547
    %v549 = vrot.slane %v548, 1
    %v550 = vadd.f32 %v548, %v549
    %v551 = vsel %vm108, %v537, 0.0
    %v552 = vrot.slane %v551, 4
    %v553 = vadd.f32 %v551, %v552
    %v554 = vrot.slane %v553, 2
    %v555 = vadd.f32 %v553, %v554
    %v556 = vrot.slane %v555, 1
    %v557 = vadd.f32 %v555, %v556
    %v558 = vsel %vm108, %v538, 0.0
    %v559 = vrot.slane %v558, 4
    %v560 = vadd.f32 %v558, %v559
    %v561 = vrot.slane %v560, 2
    %v562 = vadd.f32 %v560, %v561
    %v563 = vrot.slane %v562, 1
    %v564 = vadd.f32 %v562, %v563
    %v565 = vsel %vm108, %v539, 0.0
    %v566 = vrot.slane %v565, 4
    %v567 = vadd.f32 %v565, %v566
    %v568 = vrot.slane %v567, 2
    %v569 = vadd.f32 %v567, %v568
    %v570 = vrot.slane %v569, 1
    %v571 = vadd.f32 %v569, %v570
    %v572 = vsel %vm108, %v540, 0.0
    %v573 = vrot.slane %v572, 4
    %v574 = vadd.f32 %v572, %v573
    %v575 = vrot.slane %v574, 2
    %v576 = vadd.f32 %v574, %v575
    %v577 = vrot.slane %v576, 1
    %v578 = vadd.f32 %v576, %v577
    %v579 = vsel %vm108, %v541, 0.0
    %v580 = vrot.slane %v579, 4
    %v581 = vadd.f32 %v579, %v580
    %v582 = vrot.slane %v581, 2
    %v583 = vadd.f32 %v581, %v582
    %v584 = vrot.slane %v583, 1
    %v585 = vadd.f32 %v583, %v584
    %v586 = vsel %vm108, %v542, 0.0
    %v587 = vrot.slane %v586, 4
    %v588 = vadd.f32 %v586, %v587
    %v589 = vrot.slane %v588, 2
    %v590 = vadd.f32 %v588, %v589
    %v591 = vrot.slane %v590, 1
    %v592 = vadd.f32 %v590, %v591
    %v593 = vsel %vm108, %v543, 0.0
    %v594 = vrot.slane %v593, 4
    %v595 = vadd.f32 %v593, %v594
    %v596 = vrot.slane %v595, 2
    %v597 = vadd.f32 %v595, %v596
    %v598 = vrot.slane %v597, 1
    %v599 = vadd.f32 %v597, %v598
    %v600 = vpack.c.bf16 %v550, %v550
    %v601 = vpack.c.bf16 %v557, %v557
    %v602 = vpack.c.bf16 %v564, %v564
    %v603 = vpack.c.bf16 %v571, %v571
    %v604 = vpack.c.bf16 %v578, %v578
    %v605 = vpack.c.bf16 %v585, %v585
    %v606 = vpack.c.bf16 %v592, %v592
    %v607 = vpack.c.bf16 %v599, %v599
    %v608 = vld [vmem:[%s5] sm:$0xf]
    %v609 = vld [vmem:[%s5 + $0x4] sm:$0xf]
    %v610 = vld [vmem:[%s5 + $0x8] sm:$0xf]
    %v611 = vld [vmem:[%s5 + $0xc] sm:$0xf]
    %v612 = vld [vmem:[#allocation8] sm:$0xff]
    %v621 = vunpack.c.l.b16 %v600
    %v622 = vunpack.c.l.b16 %v601
    %v623 = vunpack.c.l.b16 %v602
    %v624 = vunpack.c.l.b16 %v603
    %v625 = vunpack.c.l.b16 %v604
    %v626 = vunpack.c.l.b16 %v605
    %v627 = vunpack.c.l.b16 %v606
    %v628 = vunpack.c.l.b16 %v607
    %v629 = vsel %vm280, %v622, %v621
    %v630 = vsel %vm282, %v623, %v629
    %v631 = vsel %vm284, %v624, %v630
    %v632 = vsel %vm286, %v625, %v631
    %v633 = vsel %vm288, %v626, %v632
    %v634 = vsel %vm290, %v627, %v633
    %v635 = vsel %vm292, %v628, %v634
    %v636 = vpack.c.b16 %v635, %v635
    %v641 = vunpack.c.l.b16 %v608
    %v642 = vunpack.c.l.b16 %v609
    %v643 = vunpack.c.l.b16 %v610
    %v644 = vunpack.c.l.b16 %v611
    %v645 = vpack.c.b16 %v642, %v641
    %v646 = vpack.c.b16 %v644, %v643
    %v650 = vsel %vm108, %v636, 0
    %652 = vmatprep.subr.bf16.mxu0 0
    %653 = vmatpush1.bf16.msra.mxu0 0
    %654 = vmatprep.subr.bf16.mxu0 0
    %655 = vmatpush1.bf16.msra.mxu0 0
    %656 = vmatprep.subr.bf16.mxu0 0
    %657 = vmatpush1.bf16.msra.mxu0 0
    %658 = vmatprep.subr.bf16.mxu0 0
    %659 = vmatpush1.bf16.msra.mxu0 0
    %660 = vmatprep.subr.bf16.mxu0 0
    %661 = vmatpush1.bf16.msra.mxu0 0
    %662 = vmatprep.subr.bf16.mxu0 0
    %663 = vmatpush1.bf16.msra.mxu0 0
    %664 = vmatprep.subr.bf16.mxu0 0
    %665 = vmatpush1.bf16.msra.mxu0 %v646
    %666 = vmatprep.subr.bf16.mxu0 0
    %667 = vmatpush1.bf16.msra.mxu0 %v645
    %668 = vmatprep.subr.bf16.mxu0 0
    %669 = vmatpush2.bf16.msra.mxu0 0
    %670 = vmatprep.subr.bf16.mxu0 0
    %671 = vmatpush2.bf16.msra.mxu0 0
    %672 = vmatprep.subr.bf16.mxu0 0
    %673 = vmatpush2.bf16.msra.mxu0 0
    %674 = vmatprep.subr.bf16.mxu0 0
    %675 = vmatpush2.bf16.msra.mxu0 0
    %676 = vmatprep.subr.bf16.mxu0 0
    %677 = vmatpush2.bf16.msra.mxu0 0
    %678 = vmatprep.subr.bf16.mxu0 0
    %679 = vmatpush2.bf16.msra.mxu0 0
    %680 = vmatprep.subr.bf16.mxu0 0
    %681 = vmatpush2.bf16.msra.mxu0 0
    %682 = vmatprep.subr.bf16.mxu0 0
    %683 = vmatpush2.bf16.msra.mxu0 0
    %684 = vmatprep.mubr.bf16.mxu0 0
    %685 = vmatmul.mubr.bf16.gmra.mxu0 %v650
    %v686 = vpop.f32.mrf.mxu0
    %v687 = vadd.f32 %v612, %v686
    %v688 = vpop.f32.mrf.mxu0
    %v689 = vpop.f32.mrf.mxu0
    %v690 = vpop.f32.mrf.mxu0
    %691 = vdwg.mxu0
    %v692 = vpack.c.bf16 %v97, %v97
    %v693 = vld [vmem:[%s6] sm:$0xf]
    %v694 = vld [vmem:[%s6 + $0x4] sm:$0xf]
    %v695 = vld [vmem:[%s6 + $0x8] sm:$0xf]
    %v696 = vld [vmem:[%s6 + $0xc] sm:$0xf]
    %v697 = vlaneseq
    %v698 = vshrl.u32 %v697, 7
    %v699 = vsub.s32 0, %v698
    %v700 = vrot.slane %v100, %v699
    %v705 = vunpack.c.l.b16 %v693
    %v706 = vunpack.c.l.b16 %v694
    %v707 = vunpack.c.l.b16 %v695
    %v708 = vunpack.c.l.b16 %v696
    %v709 = vpack.c.b16 %v706, %v705
    %v710 = vpack.c.b16 %v708, %v707
    %v714 = vsel %vm108, %v692, 0
    %716 = vmatprep.subr.bf16.mxu0 0
    %717 = vmatpush1.bf16.msra.mxu0 0
    %718 = vmatprep.subr.bf16.mxu0 0
    %719 = vmatpush1.bf16.msra.mxu0 0
    %720 = vmatprep.subr.bf16.mxu0 0
    %721 = vmatpush1.bf16.msra.mxu0 0
    %722 = vmatprep.subr.bf16.mxu0 0
    %723 = vmatpush1.bf16.msra.mxu0 0
    %724 = vmatprep.subr.bf16.mxu0 0
    %725 = vmatpush1.bf16.msra.mxu0 0
    %726 = vmatprep.subr.bf16.mxu0 0
    %727 = vmatpush1.bf16.msra.mxu0 0
    %728 = vmatprep.subr.bf16.mxu0 0
    %729 = vmatpush1.bf16.msra.mxu0 %v710
    %730 = vmatprep.subr.bf16.mxu0 0
    %731 = vmatpush1.bf16.msra.mxu0 %v709
    %732 = vmatprep.subr.bf16.mxu0 0
    %733 = vmatpush2.bf16.msra.mxu0 0
    %734 = vmatprep.subr.bf16.mxu0 0
    %735 = vmatpush2.bf16.msra.mxu0 0
    %736 = vmatprep.subr.bf16.mxu0 0
    %737 = vmatpush2.bf16.msra.mxu0 0
    %738 = vmatprep.subr.bf16.mxu0 0
    %739 = vmatpush2.bf16.msra.mxu0 0
    %740 = vmatprep.subr.bf16.mxu0 0
    %741 = vmatpush2.bf16.msra.mxu0 0
    %742 = vmatprep.subr.bf16.mxu0 0
    %743 = vmatpush2.bf16.msra.mxu0 0
    %744 = vmatprep.subr.bf16.mxu0 0
    %745 = vmatpush2.bf16.msra.mxu0 0
    %746 = vmatprep.subr.bf16.mxu0 0
    %747 = vmatpush2.bf16.msra.mxu0 0
    %748 = vmatprep.mubr.bf16.mxu0 0
    %749 = vmatmul.mubr.bf16.gmra.mxu0 %v714
    %v750 = vpop.f32.mrf.mxu0
    %v751 = vadd.f32 %v700, %v750
    %v752 = vpop.f32.mrf.mxu0
    %v753 = vpop.f32.mrf.mxu0
    %v754 = vpop.f32.mrf.mxu0
    %755 = vdwg.mxu0
    %v756 = vadd.f32 %v687, %v751
    %v757 = vxor.u32 %v756, 2147483648
    %v758 = vmul.f32 %v757, 1.442695
    %v759 = vpow.pop %v758
    %v760 = vadd.f32 %v759, 1.0
    %v761 = vrcp.pop %v760
    %v762 = vmul.f32 1.0, %v761
    %764 = vrot.lane.b32.xlu0 %v751, 64
    %v765 = vpop.permute.xlu0 %764
    %v767 = vmul.f32 %v762, %v765
    %769 = vrot.lane.b32.xlu0 %v767, 64
    %v770 = vpop.permute.xlu0 %769
    %v772 = vadd.f32 %v687, %v770
    %v773 = vtanh.pop %v772
    %v774 = vsub.f32 1.0, %v762
    %776 = vrot.lane.b32.xlu0 %v773, 96
    %v777 = vpop.permute.xlu0 %776
    %v779 = vmul.f32 %v774, %v777
    %781 = vrot.lane.b32.xlu0 %v97, 32
    %v782 = vpop.permute.xlu0 %781
    %v784 = vmul.f32 %v762, %v782
    %v785 = vadd.f32 %v779, %v784
    %v786 = vpack.c.bf16 %v785, %v785
    %v787 = vld [vmem:[%s7] sm:$0xf]
    %v788 = vld [vmem:[%s7 + $0x4] sm:$0xf]
    %v789 = vld [vmem:[%s7 + $0x8] sm:$0xf]
    %v790 = vld [vmem:[%s7 + $0xc] sm:$0xf]
    %v791 = vlaneseq
    %v792 = vshrl.u32 %v791, 7
    %v793 = vsub.s32 0, %v792
    %v794 = vrot.slane %v101, %v793
    %796 = vrot.lane.b32.xlu0 %v786, 96
    %v797 = vpop.permute.xlu0 %796
    %v802 = vunpack.c.l.b16 %v787
    %v803 = vunpack.c.l.b16 %v788
    %v804 = vunpack.c.l.b16 %v789
    %v805 = vunpack.c.l.b16 %v790
    %v806 = vpack.c.b16 %v803, %v802
    %v807 = vpack.c.b16 %v805, %v804
    %v811 = vsel %vm108, %v797, 0
    %813 = vmatprep.subr.bf16.mxu0 0
    %814 = vmatpush1.bf16.msra.mxu0 0
    %815 = vmatprep.subr.bf16.mxu0 0
    %816 = vmatpush1.bf16.msra.mxu0 0
    %817 = vmatprep.subr.bf16.mxu0 0
    %818 = vmatpush1.bf16.msra.mxu0 0
    %819 = vmatprep.subr.bf16.mxu0 0
    %820 = vmatpush1.bf16.msra.mxu0 0
    %821 = vmatprep.subr.bf16.mxu0 0
    %822 = vmatpush1.bf16.msra.mxu0 0
    %823 = vmatprep.subr.bf16.mxu0 0
    %824 = vmatpush1.bf16.msra.mxu0 0
    %825 = vmatprep.subr.bf16.mxu0 0
    %826 = vmatpush1.bf16.msra.mxu0 %v807
    %827 = vmatprep.subr.bf16.mxu0 0
    %828 = vmatpush1.bf16.msra.mxu0 %v806
    %829 = vmatprep.subr.bf16.mxu0 0
    %830 = vmatpush2.bf16.msra.mxu0 0
    %831 = vmatprep.subr.bf16.mxu0 0
    %832 = vmatpush2.bf16.msra.mxu0 0
    %833 = vmatprep.subr.bf16.mxu0 0
    %834 = vmatpush2.bf16.msra.mxu0 0
    %835 = vmatprep.subr.bf16.mxu0 0
    %836 = vmatpush2.bf16.msra.mxu0 0
    %837 = vmatprep.subr.bf16.mxu0 0
    %838 = vmatpush2.bf16.msra.mxu0 0
    %839 = vmatprep.subr.bf16.mxu0 0
    %840 = vmatpush2.bf16.msra.mxu0 0
    %841 = vmatprep.subr.bf16.mxu0 0
    %842 = vmatpush2.bf16.msra.mxu0 0
    %843 = vmatprep.subr.bf16.mxu0 0
    %844 = vmatpush2.bf16.msra.mxu0 0
    %845 = vmatprep.mubr.bf16.mxu0 0
    %846 = vmatmul.mubr.bf16.gmra.mxu0 %v811
    %v847 = vpop.f32.mrf.mxu0
    %v848 = vadd.f32 %v794, %v847
    %v849 = vpop.f32.mrf.mxu0
    %v850 = vpop.f32.mrf.mxu0
    %v851 = vpop.f32.mrf.mxu0
    %852 = vdwg.mxu0
    %v853 = vpack.c.bf16 %v848, %v848
    %v854 = vld [vmem:[#allocation9] sm:$0xf]
    %v855 = vld [vmem:[#allocation9 + $0x4] sm:$0xf]
    %v858 = vunpack.c.l.b16 %v854
    %v859 = vunpack.c.l.b16 %v855
    %v860 = vpack.c.b16 %v859, %v858
    %vm862 = vcmask 130048
    %v864 = vsel %vm862, %v853, 0
    %866 = vmatprep.subr.bf16.mxu0 0
    %867 = vmatpush1.bf16.msra.mxu0 0
    %868 = vmatprep.subr.bf16.mxu0 0
    %869 = vmatpush1.bf16.msra.mxu0 0
    %870 = vmatprep.subr.bf16.mxu0 0
    %871 = vmatpush1.bf16.msra.mxu0 0
    %872 = vmatprep.subr.bf16.mxu0 0
    %873 = vmatpush1.bf16.msra.mxu0 0
    %874 = vmatprep.subr.bf16.mxu0 0
    %875 = vmatpush1.bf16.msra.mxu0 0
    %876 = vmatprep.subr.bf16.mxu0 0
    %877 = vmatpush1.bf16.msra.mxu0 0
    %878 = vmatprep.subr.bf16.mxu0 0
    %879 = vmatpush1.bf16.msra.mxu0 0
    %880 = vmatprep.subr.bf16.mxu0 0
    %881 = vmatpush1.bf16.msra.mxu0 %v860
    %882 = vmatprep.subr.bf16.mxu0 0
    %883 = vmatpush2.bf16.msra.mxu0 0
    %884 = vmatprep.subr.bf16.mxu0 0
    %885 = vmatpush2.bf16.msra.mxu0 0
    %886 = vmatprep.subr.bf16.mxu0 0
    %887 = vmatpush2.bf16.msra.mxu0 0
    %888 = vmatprep.subr.bf16.mxu0 0
    %889 = vmatpush2.bf16.msra.mxu0 0
    %890 = vmatprep.subr.bf16.mxu0 0
    %891 = vmatpush2.bf16.msra.mxu0 0
    %892 = vmatprep.subr.bf16.mxu0 0
    %893 = vmatpush2.bf16.msra.mxu0 0
    %894 = vmatprep.subr.bf16.mxu0 0
    %895 = vmatpush2.bf16.msra.mxu0 0
    %896 = vmatprep.subr.bf16.mxu0 0
    %897 = vmatpush2.bf16.msra.mxu0 0
    %898 = vmatprep.mubr.bf16.mxu0 0
    %899 = vmatmul.mubr.bf16.gmra.mxu0 %v864
    %v900 = vpop.f32.mrf.mxu0
    %v901 = vadd.f32 0.0, %v900
    %v902 = vpop.f32.mrf.mxu0
    %v903 = vpop.f32.mrf.mxu0
    %v904 = vpop.f32.mrf.mxu0
    %905 = vdwg.mxu0
    %906 = vst [vmem:[#allocation11] sm:$0xff] %v901
    %908 = vrot.lane.b32.xlu0 %v785, 96
    %v909 = vpop.permute.xlu0 %908
    %911 = vst.msk [vmem:[#allocation12] sm:$0xff] %vm108, %v909
    // Predicated region
    $region54: #{tpu_custom_call.1} parent=1 // pred_check
      _
    $region55: #{tpu_custom_call.1} parent=1 // pred_check_branch
      %913 = sbr.rel (0) target = $region57
    $region56: #{tpu_custom_call.1} parent=1 // pred_region
      %s915 = ssub.s32 128, 128
      %916 = vsyncadd [#allocation5], %s915
      %s918 = sshll.u32 [#allocation11], 4
      %s919 = int_to_ptr.vmem [resolvable:$true] %s918
      %921 = dma.vmem_to_hbm [thread:$0]  %s919, 128, %s9, [#allocation5]
    $region57: #{tpu_custom_call.1} parent=1 // pred_fallthru
      _
    // Predicated region
    $region58: #{tpu_custom_call.1} parent=1 // pred_check
      _
    $region59: #{tpu_custom_call.1} parent=1 // pred_check_branch
      %923 = sbr.rel (0) target = $region61
    $region60: #{tpu_custom_call.1} parent=1 // pred_region
      %s925 = ssub.s32 128, 128
      %926 = vsyncadd [#allocation13], %s925
      %s928 = sshll.u32 [#allocation12], 4
      %s929 = int_to_ptr.vmem [resolvable:$true] %s928
      %931 = dma.vmem_to_hbm [thread:$0]  %s929, 128, %s10, [#allocation13]
    $region61: #{tpu_custom_call.1} parent=1 // pred_fallthru
      _
    // Predicated region
    $region62: #{tpu_custom_call.1} parent=1 // pred_check
      _
    $region63: #{tpu_custom_call.1} parent=1 // pred_check_branch
      %933 = sbr.rel (0) target = $region65
    $region64: #{tpu_custom_call.1} parent=1 // pred_region
      %934 = dma.done [#allocation5], 128
    $region65: #{tpu_custom_call.1} parent=1 // pred_fallthru
      _
    // Predicated region
    $region66: #{tpu_custom_call.1} parent=1 // pred_check
      _
    $region67: #{tpu_custom_call.1} parent=1 // pred_check_branch
      %936 = sbr.rel (0) target = $region69
    $region68: #{tpu_custom_call.1} parent=1 // pred_region
      %937 = dma.done [#allocation13], 128
    $region69: #{tpu_custom_call.1} parent=1 // pred_fallthru
      _
    %938 = vsyncpa [#allocation4], 1
    %939 = vsyncpa [#allocation7], 1
    %940 = vsyncpa [#allocation10], 1
    %941 = vsyncpa [#allocation5], 1
    %942 = vsyncpa [#allocation13], 1

</llo_original>
